<compile_context>
chip_gen: v7x
topology: tpu7x:2x2x1
jax: 0.10.0
libtpu: 0.0.40
codegen_flags: <defaults>
</compile_context>

<pallas_src>
import functools

import jax
import jax.numpy as jnp
from jax.experimental import pallas as pl
from jax.experimental.pallas import tpu as pltpu


_LANE = 128


@functools.lru_cache(maxsize=None)
def _vmem_block_budget():
    """Generation-aware VMEM budget for the kernels' double-buffered blocks."""
    cap = None
    try:
        info = pltpu.get_tpu_info()
        for attr in ("vmem_capacity_bytes", "vmem_bytes", "vmem_size_bytes"):
            v = getattr(info, attr, None)
            if v:
                cap = int(v)
                break
    except Exception:
        cap = None
    if cap is None:
        cap = 64 << 20                      # conservative: assume v7x-sized VMEM
    if cap >= (96 << 20):                   # v5e / v6e: 128 MiB physical VMEM
        return 80 << 20                     # ~80 MiB block space, big headroom
    return 40 << 20                         # v7x: 64 MiB physical, ~20+ MiB headroom


def _round_up(v, m):
    return (v + m - 1) // m * m


def _leaky_relu(x):
    # nn.LeakyReLU(negative_slope=0.1) in the original module.
    return jnp.where(x >= 0, x, 0.1 * x)


def _largest_hw_tile(hwp, max_lanes):
    """Largest multiple of 128 that divides hwp and is <= max_lanes (>= 128)."""
    thw = min(hwp, max(_LANE, (max_lanes // _LANE) * _LANE))
    while hwp % thw != 0:
        thw -= _LANE
    return thw


def _pick_nb(n, max_nb, target_steps):
    """Samples per grid step: <= max_nb, divides n, keeps >= target_steps steps."""
    nb = max(1, min(n, max_nb))
    while nb > 1 and (n // nb) < target_steps:
        nb -= 1
    while n % nb != 0:
        nb -= 1
    return nb


# -----------------------------------------------------------------------------
# Single-pass kernel: whole (nb, C, HW_pad) slab per grid step.
# -----------------------------------------------------------------------------
def _se_fused_kernel(inv_hw, x_ref, wr_ref, we_ref, o_ref):
    x = x_ref[...]                                            # (nb, C, HWp), native dtype
    # f32-accumulated GAP without an explicit full-block f32 copy; padding
    # lanes are zero, so dividing by the TRUE spatial size is exact.
    gap = jnp.sum(x, axis=-1, dtype=jnp.float32) * inv_hw     # (nb, C) f32
    wr = wr_ref[...].astype(jnp.float32)                      # (C, C)
    we = we_ref[...].astype(jnp.float32)                      # (C_out, C)
    # conv_reduce (1x1, no bias): s[n, o] = sum_i gap[n, i] * wr[o, i]
    s = jax.lax.dot_general(gap, wr, (((1,), (1,)), ((), ())),
                            preferred_element_type=jnp.float32)
    s = _leaky_relu(s)
    # conv_expand (1x1, no bias)
    e = jax.lax.dot_general(s, we, (((1,), (1,)), ((), ())),
                            preferred_element_type=jnp.float32)
    gate = jax.nn.sigmoid(e)                                  # (nb, C_out) f32
    # Gate in the input's native dtype (no full-tile f32 copy of x).
    o_ref[...] = x * gate[:, :, None].astype(o_ref.dtype)


# -----------------------------------------------------------------------------
# Two-pass kernels (slabs too big for VMEM): gate computation + gating.
# -----------------------------------------------------------------------------
def _se_gate_kernel(inv_hw, x_ref, wr_ref, we_ref, gate_ref, acc_ref):
    t = pl.program_id(1)

    @pl.when(t == 0)
    def _():
        acc_ref[...] = jnp.zeros_like(acc_ref)

    # Partial spatial sum of this HW tile, accumulated in f32.
    acc_ref[...] += jnp.sum(x_ref[...], axis=-1, dtype=jnp.float32)   # (nb1, C)

    @pl.when(t == pl.num_programs(1) - 1)
    def _():
        gap = acc_ref[...] * inv_hw                           # (nb1, C)
        wr = wr_ref[...].astype(jnp.float32)
        we = we_ref[...].astype(jnp.float32)
        s = jax.lax.dot_general(gap, wr, (((1,), (1,)), ((), ())),
                                preferred_element_type=jnp.float32)
        s = _leaky_relu(s)
        e = jax.lax.dot_general(s, we, (((1,), (1,)), ((), ())),
                                preferred_element_type=jnp.float32)
        gate_ref[...] = jax.nn.sigmoid(e)[None, :, :]          # (1, nb1, C_out)


def _se_apply_kernel(nb, x_ref, gate_ref, o_ref):
    # gate_ref holds the whole (N, C_out) gate resident in VMEM; slice the
    # nb samples of this step and stream x * gate in the native dtype.
    n = pl.program_id(0)
    g = gate_ref[pl.ds(n * nb, nb), :]                         # (nb, C_out) f32
    o_ref[...] = x_ref[...] * g[:, :, None].astype(o_ref.dtype)


# -----------------------------------------------------------------------------
# pallas_call wrappers
# -----------------------------------------------------------------------------
def _se_fused_call(x, w_reduce, w_expand, inv_hw, budget):
    N, C, HWp = x.shape
    C_out = w_expand.shape[0]
    xb = x.dtype.itemsize
    wb = w_reduce.dtype.itemsize

    # Per-sample footprint: in + out blocks, each double-buffered, plus a
    # possible f32 reduce temporary for sub-32-bit inputs.
    f32_tmp = C * HWp * 4 if xb < 4 else 0
    per_sample = 4 * C * HWp * xb + f32_tmp
    nb = _pick_nb(N, max(1, budget // per_sample), min(4, N))
    grid = (N // nb,)

    needed = nb * per_sample + 2 * (C * C + C_out * C) * wb
    vmem_limit = int(max(needed + (4 << 20), 16 << 20))

    cost = pl.CostEstimate(
        flops=int(2 * N * (C * C + C_out * C) + 2 * N * C * HWp),
        transcendentals=int(N * C_out),
        bytes_accessed=int((N * C * HWp + N * C_out * HWp) * xb
                           + (C * C + C_out * C) * wb))

    return pl.pallas_call(
        functools.partial(_se_fused_kernel, inv_hw),
        out_shape=jax.ShapeDtypeStruct((N, C_out, HWp), x.dtype),
        grid_spec=pltpu.PrefetchScalarGridSpec(
            num_scalar_prefetch=0,
            grid=grid,
            in_specs=[
                pl.BlockSpec((nb, C, HWp), lambda i: (i, 0, 0)),
                pl.BlockSpec((C, C), lambda i: (0, 0)),
                pl.BlockSpec((C_out, C), lambda i: (0, 0)),
            ],
            out_specs=pl.BlockSpec((nb, C_out, HWp), lambda i: (i, 0, 0)),
        ),
        compiler_params=pltpu.CompilerParams(
            dimension_semantics=("parallel",),
            vmem_limit_bytes=vmem_limit),
        cost_estimate=cost,
    )(x, w_reduce, w_expand)


def _se_two_pass_call(x, w_reduce, w_expand, inv_hw, budget, hw_tile=None):
    N, C, HWp = x.shape
    C_out = w_expand.shape[0]
    xb = x.dtype.itemsize
    wb = w_reduce.dtype.itemsize
    target_steps = min(4, N)

    # ---- pass 1: per-sample gate = sigmoid(We . leaky(Wr . GAP(x))) --------
    # Only the input block is double-buffered here (gate output is tiny), so
    # this pass can run ~2x the apply-pass tile under the same budget.
    f32_tmp_per_lane = C * 4 if xb < 4 else 0
    l1 = max(_LANE, budget // (2 * C * xb + f32_tmp_per_lane))
    if hw_tile is not None:
        l1 = min(l1, max(_LANE, (hw_tile // _LANE) * _LANE))
    if HWp <= l1:
        thw1 = HWp
        nb1 = _pick_nb(N, l1 // HWp, target_steps)
    else:
        thw1 = _largest_hw_tile(HWp, l1)
        nb1 = 1
    n_hw1 = HWp // thw1

    needed1 = (nb1 * thw1 * (2 * C * xb + f32_tmp_per_lane)
               + 2 * (C * C + C_out * C) * wb
               + 2 * nb1 * C_out * 4 + nb1 * C * 4)
    gate3 = pl.pallas_call(
        functools.partial(_se_gate_kernel, inv_hw),
        out_shape=jax.ShapeDtypeStruct((N // nb1, nb1, C_out), jnp.float32),
        grid_spec=pltpu.PrefetchScalarGridSpec(
            num_scalar_prefetch=0,
            grid=(N // nb1, n_hw1),
            in_specs=[
                pl.BlockSpec((nb1, C, thw1), lambda n, t: (n, 0, t)),
                pl.BlockSpec((C, C), lambda n, t: (0, 0)),
                pl.BlockSpec((C_out, C), lambda n, t: (0, 0)),
            ],
            out_specs=pl.BlockSpec((1, nb1, C_out), lambda n, t: (n, 0, 0)),
            scratch_shapes=[pltpu.VMEM((nb1, C), jnp.float32)],
        ),
        compiler_params=pltpu.CompilerParams(
            dimension_semantics=("parallel", "arbitrary"),
            vmem_limit_bytes=int(max(needed1 + (4 << 20), 16 << 20))),
        cost_estimate=pl.CostEstimate(
            flops=int(2 * N * (C * C + C_out * C) + N * C * HWp),
            transcendentals=int(N * C_out),
            bytes_accessed=int(N * C * HWp * xb + (C * C + C_out * C) * wb)),
    )(x, w_reduce, w_expand)
    gate = gate3.reshape(N, C_out)                 # lane-dense (N, C_out) f32

    # ---- pass 2: stream x * gate; whole gate stays resident in VMEM --------
    gate_bytes = 2 * N * C_out * 4
    l2 = max(_LANE, (budget - gate_bytes) // (4 * C * xb))
    if hw_tile is not None:
        l2 = min(l2, max(_LANE, (hw_tile // _LANE) * _LANE))
    if HWp <= l2:
        thw2 = HWp
        nb2 = _pick_nb(N, l2 // HWp, target_steps)
    else:
        thw2 = _largest_hw_tile(HWp, l2)
        nb2 = 1
    n_hw2 = HWp // thw2

    needed2 = 4 * nb2 * C * thw2 * xb + gate_bytes
    return pl.pallas_call(
        functools.partial(_se_apply_kernel, nb2),
        out_shape=jax.ShapeDtypeStruct((N, C_out, HWp), x.dtype),
        grid_spec=pltpu.PrefetchScalarGridSpec(
            num_scalar_prefetch=0,
            grid=(N // nb2, n_hw2),
            in_specs=[
                pl.BlockSpec((nb2, C, thw2), lambda n, t: (n, 0, t)),
                # Full gate array, constant block index -> resident in VMEM,
                # no tiny per-step DMA on the streaming multiply's critical path.
                pl.BlockSpec((N, C_out), lambda n, t: (0, 0)),
            ],
            out_specs=pl.BlockSpec((nb2, C_out, thw2), lambda n, t: (n, 0, t)),
        ),
        compiler_params=pltpu.CompilerParams(
            dimension_semantics=("parallel", "parallel"),
            vmem_limit_bytes=int(max(needed2 + (4 << 20), 16 << 20))),
        cost_estimate=pl.CostEstimate(
            flops=int(N * C_out * HWp),
            transcendentals=0,
            bytes_accessed=int(2 * N * C * HWp * xb + N * C_out * 4)),
    )(x, gate)


def se_forward(x_nchw, w_reduce, w_expand, stride, *,
               force_two_pass=False, hw_tile=None):
    """SE forward. x: (N, C_in, H, W); w_reduce: (C_in, C_in); w_expand: (C_out, C_in)."""
    N, C, H, W = x_nchw.shape
    C_out = w_expand.shape[0]
    assert w_reduce.shape == (C, C), w_reduce.shape
    assert w_expand.shape == (C_out, C), w_expand.shape
    # Final broadcasted multiply (x * sigmoid(x_se)) requires C_out == C_in,
    # same constraint the PyTorch module implicitly imposes.
    assert C_out == C, (C_out, C)

    if stride == 2:
        # nn.MaxPool2d(kernel_size=2, stride=2) — plain-JAX glue preprocessing.
        x_nchw = jax.lax.reduce_window(
            x_nchw, -jnp.inf, jax.lax.max,
            window_dimensions=(1, 1, 2, 2), window_strides=(1, 1, 2, 2),
            padding="VALID")
        H, W = H // 2, W // 2

    HW = H * W
    HWp = _round_up(HW, _LANE)                   # lane-dense, 128-aligned spatial
    x = x_nchw.reshape(N, C, HW)
    if HWp != HW:
        x = jnp.pad(x, ((0, 0), (0, 0), (0, HWp - HW)))
    inv_hw = 1.0 / float(HW)                     # divide by the TRUE spatial size

    budget = _vmem_block_budget()
    xb = x.dtype.itemsize
    f32_tmp = C * HWp * 4 if xb < 4 else 0
    single_pass_ok = (4 * C * HWp * xb + f32_tmp) <= budget
    if single_pass_ok and not force_two_pass:
        out = _se_fused_call(x, w_reduce, w_expand, inv_hw, budget)
    else:
        out = _se_two_pass_call(x, w_reduce, w_expand, inv_hw, budget,
                                hw_tile=hw_tile)

    if HWp != HW:
        out = out[:, :, :HW]
    return out.reshape(N, C_out, H, W)


def se_ref(x, wr, we, stride):
    """Pure-JAX reference mirroring the PyTorch forward."""
    if stride == 2:
        x = jax.lax.reduce_window(
            x, -jnp.inf, jax.lax.max, (1, 1, 2, 2), (1, 1, 2, 2), "VALID")
    gap = x.mean(axis=(2, 3))                                 # (N, C_in)
    s = gap @ wr.T
    s = jnp.where(s >= 0, s, 0.1 * s)
    e = s @ we.T
    gate = jax.nn.sigmoid(e)[:, :, None, None]
    return x * gate


if __name__ == "__main__":
    key = jax.random.PRNGKey(0)
    kx, kr, ke = jax.random.split(key, 3)

    N, C_in, C_out, H, W = 8, 8, 8, 16, 16   # C_out == C_in required by the
                                             # module's broadcasted multiply
    x = jax.random.normal(kx, (N, C_in, H, W), dtype=jnp.float32)
    # deterministic synthetic weights for the two 1x1 convs (no bias)
    w_reduce = jax.random.normal(kr, (C_in, C_in), dtype=jnp.float32) * 0.2
    w_expand = jax.random.normal(ke, (C_out, C_in), dtype=jnp.float32) * 0.2

    configs = (
        dict(force_two_pass=False, hw_tile=None),   # fused single pass (packed nb)
        dict(force_two_pass=True, hw_tile=None),    # two-pass, packed samples
        dict(force_two_pass=True, hw_tile=128),     # two-pass, tiled-HW accumulation
    )
    for stride in (1, 2):
        ref = se_ref(x, w_reduce, w_expand, stride)
        for cfg in configs:
            out = se_forward(x, w_reduce, w_expand, stride, **cfg)
            out = jax.block_until_ready(out)
            assert out.shape == ref.shape, (out.shape, ref.shape)
            assert jnp.allclose(out, ref, atol=1e-5, rtol=1e-5), (
                f"mismatch at stride={stride}, cfg={cfg}")

    print("KERNEL_OK")
</pallas_src>

<mosaic_0001>
module attributes {stable_mosaic.version = 11 : i64} {
  func.func @_se_fused_kernel(%arg0: i32, %arg1: memref<2x8x256xf32, #tpu.memory_space<vmem>>, %arg2: memref<8x8xf32, #tpu.memory_space<vmem>>, %arg3: memref<8x8xf32, #tpu.memory_space<vmem>>, %arg4: memref<2x8x256xf32, #tpu.memory_space<vmem>>) attributes {dimension_semantics = [#tpu.dimension_semantics<parallel>], iteration_bounds = array<i64: 4>, scalar_prefetch = 0 : i64, scratch_operands = 0 : i64, tpu.core_type = #tpu.core_type<tc>, window_params = [{transform_indices = @transform_0, window_bounds = array<i64: 2, 8, 256>}, {pipeline_mode = #tpu.pipeline_mode<synchronous>, transform_indices = @transform_1, window_bounds = array<i64: 8, 8>}, {pipeline_mode = #tpu.pipeline_mode<synchronous>, transform_indices = @transform_2, window_bounds = array<i64: 8, 8>}, {transform_indices = @transform_3, window_bounds = array<i64: 2, 8, 256>}]} {
    %c0 = arith.constant 0 : index
    %c0_0 = arith.constant 0 : index
    %c0_1 = arith.constant 0 : index
    %0 = vector.load %arg1[%c0, %c0_0, %c0_1] : memref<2x8x256xf32, #tpu.memory_space<vmem>>, vector<2x8x256xf32>
    %cst = arith.constant dense<0.000000e+00> : vector<2x8xf32>
    %1 = vector.multi_reduction <add>, %0, %cst [2] : vector<2x8x256xf32> to vector<2x8xf32>
    %cst_2 = arith.constant 3.906250e-03 : f32
    %2 = vector.broadcast %cst_2 : f32 to vector<2x8xf32>
    %3 = arith.mulf %1, %2 : vector<2x8xf32>
    %c0_3 = arith.constant 0 : index
    %c0_4 = arith.constant 0 : index
    %4 = vector.load %arg2[%c0_3, %c0_4] : memref<8x8xf32, #tpu.memory_space<vmem>>, vector<8x8xf32>
    %c0_5 = arith.constant 0 : index
    %c0_6 = arith.constant 0 : index
    %5 = vector.load %arg3[%c0_5, %c0_6] : memref<8x8xf32, #tpu.memory_space<vmem>>, vector<8x8xf32>
    %cst_7 = arith.constant dense<0.000000e+00> : vector<2x8xf32>
    %6 = tpu.matmul %3, %4, %cst_7 {dimension_numbers = #tpu.dot_dimension_numbers<[1], [1], [0], [0], [0, 0, 1, 0], [], []>} : vector<2x8xf32>, vector<8x8xf32>, vector<2x8xf32> -> vector<2x8xf32>
    %cst_8 = arith.constant 0.000000e+00 : f32
    %7 = vector.broadcast %cst_8 : f32 to vector<2x8xf32>
    %8 = arith.cmpf oge, %6, %7 : vector<2x8xf32>
    %cst_9 = arith.constant 1.000000e-01 : f32
    %9 = vector.broadcast %cst_9 : f32 to vector<2x8xf32>
    %10 = arith.mulf %9, %6 : vector<2x8xf32>
    %11 = arith.select %8, %6, %10 : vector<2x8xi1>, vector<2x8xf32>
    %cst_10 = arith.constant dense<0.000000e+00> : vector<2x8xf32>
    %12 = tpu.matmul %11, %5, %cst_10 {dimension_numbers = #tpu.dot_dimension_numbers<[1], [1], [0], [0], [0, 0, 1, 0], [], []>} : vector<2x8xf32>, vector<8x8xf32>, vector<2x8xf32> -> vector<2x8xf32>
    %13 = arith.negf %12 : vector<2x8xf32>
    %14 = math.exp %13 : vector<2x8xf32>
    %cst_11 = arith.constant 1.000000e+00 : f32
    %15 = vector.broadcast %cst_11 : f32 to vector<2x8xf32>
    %16 = arith.addf %15, %14 : vector<2x8xf32>
    %17 = arith.divf %15, %16 : vector<2x8xf32>
    %18 = vector.shape_cast %17 : vector<2x8xf32> to vector<2x8x1xf32>
    %19 = vector.broadcast %18 : vector<2x8x1xf32> to vector<2x8x256xf32>
    %20 = arith.mulf %0, %19 : vector<2x8x256xf32>
    %c0_12 = arith.constant 0 : index
    %c0_13 = arith.constant 0 : index
    %c0_14 = arith.constant 0 : index
    %21 = vector.load %arg4[%c0_12, %c0_13, %c0_14] : memref<2x8x256xf32, #tpu.memory_space<vmem>>, vector<2x8x256xf32>
    tpu.vector_store %arg4[%c0_12, %c0_13, %c0_14], %20 {strides = array<i32>} : memref<2x8x256xf32, #tpu.memory_space<vmem>>, vector<2x8x256xf32>,
    return
  }
  func.func @transform_0(%arg0: i32) -> (i32, i32, i32) {
    %c0_i32 = arith.constant 0 : i32
    %c0_i32_0 = arith.constant 0 : i32
    %c0_i32_1 = arith.constant 0 : i32
    return %arg0, %c0_i32, %c0_i32_0 : i32, i32, i32
  }
  func.func @transform_1(%arg0: i32) -> (i32, i32) {
    %c0_i32 = arith.constant 0 : i32
    %c0_i32_0 = arith.constant 0 : i32
    %c0_i32_1 = arith.constant 0 : i32
    return %c0_i32, %c0_i32_0 : i32, i32
  }
  func.func @transform_2(%arg0: i32) -> (i32, i32) {
    %c0_i32 = arith.constant 0 : i32
    %c0_i32_0 = arith.constant 0 : i32
    %c0_i32_1 = arith.constant 0 : i32
    return %c0_i32, %c0_i32_0 : i32, i32
  }
  func.func @transform_3(%arg0: i32) -> (i32, i32, i32) {
    %c0_i32 = arith.constant 0 : i32
    %c0_i32_0 = arith.constant 0 : i32
    %c0_i32_1 = arith.constant 0 : i32
    return %arg0, %c0_i32, %c0_i32_0 : i32, i32, i32
  }
}

</mosaic_0001>

<llo_original>
// kernel: tpu_custom_call.1
$region0: #{tpu_custom_call.1}
  #allocation0 [shape = 'u32[]', space=smem, size = 0x4, offset = 0x4, fixed_abs, tag = 'smem constant byte address 0x4 - core index']
  #allocation1 [shape = 'u32[144,128]{1,0:T(1,128)}', space=vmem, size = 0x12000, scoped, tag = 'internal scratch']
  %s0 = inlined_call_operand.hbm [shape: f32[8,8,256], index: 0, kind: input, shape index: {}]
  %s1 = inlined_call_operand.hbm [shape: f32[8,8], index: 1, kind: input, shape index: {}]
  %s2 = inlined_call_operand.hbm [shape: f32[8,8], index: 2, kind: input, shape index: {}]
  %s3 = inlined_call_operand.hbm [shape: f32[8,8,256], index: 3, kind: output, shape index: {}]
  %s4 = sld [smem:[#allocation0]]
  $region57: #{tpu_custom_call.1} parent=0
    _
  %s6 = ssub.s32 1, %s4
  %s7 = scalar_select 0, %s6, %s4
  $region1: #{tpu_custom_call.1} parent=0
    #allocation2 [shape = 'u8[32768]{0}', space=vmem, size = 0x8000, scoped, tag = 'input window, operand 0']
    #allocation3 [shape = 's32[2]{0}', space=sflag, size = 0x8, scoped, tag = 'scoped memory for tpu_custom_call.1']
    #allocation4 [shape = 's32[2]{0}', space=sflag, size = 0x8, scoped, tag = 'scoped memory for tpu_custom_call.1']
    #allocation5 [shape = 'u8[4096]{0}', space=vmem, size = 0x1000, scoped, tag = 'input window, operand 1, single buffered']
    #allocation6 [shape = 's32[1]{0}', space=sflag, size = 0x4, scoped, tag = 'scoped memory for tpu_custom_call.1']
    #allocation7 [shape = 'u8[4096]{0}', space=vmem, size = 0x1000, scoped, tag = 'input window, operand 2, single buffered']
    #allocation8 [shape = 'u8[32768]{0}', space=vmem, size = 0x8000, scoped, tag = 'output window, operand 0']
    %8 = vsyncpa [#allocation3], 0
    %s9 = scalar_lea.sflag [#allocation3], 1
    %10 = vsyncpa %s9, 0
    %11 = vsyncpa [#allocation6], 0
    %12 = vsyncpa [#allocation4], 0
    %s13 = scalar_lea.sflag [#allocation4], 1
    %14 = vsyncpa %s13, 0
    loop: start=0, step=1, limit=6
    $region2: #{tpu_custom_call.1} parent=1 // loop_pre_header
      _
    $region3: #{tpu_custom_call.1} parent=1 // loop_header
      %s16 = sphi 0, %s20
      %p17 = scmp.ge.s32.totalorder %s16, 6
      %s26 = sphi 0, %s28
      %s29 = sphi 0, %s26
      %s30 = sphi 0, %s29
      %s46 = sphi 0, %s30
      %s50 = sphi 0, %s50
      %s52 = sphi 0, %s50
      %s53 = sphi 0, %s52
      %s67 = sphi 0, %s53
      %s71 = sphi 0, %s71
      %s73 = sphi 0, %s71
      %s74 = sphi 0, %s73
      %s88 = sphi 0, %s74
      %s94 = sphi 0, %s96
      %s97 = sphi 0, %s94
      %s98 = sphi 0, %s97
      %s114 = sphi 0, %s98
    $region4: #{tpu_custom_call.1} parent=1 // loop_header_branch
      %19 = sbr.rel (%p17) target = $region8
    $region5: #{tpu_custom_call.1} parent=1 // loop_body
      %s21 = ssub.s32 %s16, 1
      %s22 = ssub.s32 %s16, 2
      %s23 = sadd.s32 %s16, 1
      %s24 = ssub.s32 %s16, %s23
      %p25 = scmp.eq.s32.totalorder %s24, 0
      %s27 = sadd.s32 %s26, 1
      %s28 = scalar_select %p25, %s26, %s27
      %p31 = pneg %p25
      %p32 = scmp.eq.s32.totalorder %s16, 3
      %p33 = por %p31, %p32
      %p34 = scmp.ne.s32.totalorder %s26, %s29
      %p35 = scmp.eq.s32.totalorder %s16, 0
      %p36 = por %p34, %p35
      %p37 = scmp.ne.s32.totalorder %s26, %s29
      %p38 = scmp.eq.s32.totalorder %s21, 3
      %p39 = por %p37, %p38
      %p40 = scmp.ne.s32.totalorder %s29, %s30
      %p41 = scmp.eq.s32.totalorder %s21, 0
      %p42 = por %p40, %p41
      %p43 = scmp.ne.s32.totalorder %s29, %s30
      %p44 = scmp.eq.s32.totalorder %s22, 3
      %p45 = por %p43, %p44
      %p47 = scmp.ne.s32.totalorder %s30, %s46
      %p48 = scmp.eq.s32.totalorder %s22, 0
      %p49 = por %p47, %p48
      %s51 = sadd.s32 %s50, 1
      %p54 = scmp.eq.s32.totalorder %s16, 3
      %p55 = scmp.ne.s32.totalorder %s50, %s52
      %p56 = scmp.eq.s32.totalorder %s16, 0
      %p57 = por %p55, %p56
      %p58 = scmp.ne.s32.totalorder %s50, %s52
      %p59 = scmp.eq.s32.totalorder %s21, 3
      %p60 = por %p58, %p59
      %p61 = scmp.ne.s32.totalorder %s52, %s53
      %p62 = scmp.eq.s32.totalorder %s21, 0
      %p63 = por %p61, %p62
      %p64 = scmp.ne.s32.totalorder %s52, %s53
      %p65 = scmp.eq.s32.totalorder %s22, 3
      %p66 = por %p64, %p65
      %p68 = scmp.ne.s32.totalorder %s53, %s67
      %p69 = scmp.eq.s32.totalorder %s22, 0
      %p70 = por %p68, %p69
      %s72 = sadd.s32 %s71, 1
      %p75 = scmp.eq.s32.totalorder %s16, 3
      %p76 = scmp.ne.s32.totalorder %s71, %s73
      %p77 = scmp.eq.s32.totalorder %s16, 0
      %p78 = por %p76, %p77
      %p79 = scmp.ne.s32.totalorder %s71, %s73
      %p80 = scmp.eq.s32.totalorder %s21, 3
      %p81 = por %p79, %p80
      %p82 = scmp.ne.s32.totalorder %s73, %s74
      %p83 = scmp.eq.s32.totalorder %s21, 0
      %p84 = por %p82, %p83
      %p85 = scmp.ne.s32.totalorder %s73, %s74
      %p86 = scmp.eq.s32.totalorder %s22, 3
      %p87 = por %p85, %p86
      %p89 = scmp.ne.s32.totalorder %s74, %s88
      %p90 = scmp.eq.s32.totalorder %s22, 0
      %p91 = por %p89, %p90
      %s92 = ssub.s32 %s16, %s23
      %p93 = scmp.eq.s32.totalorder %s92, 0
      %s95 = sadd.s32 %s94, 1
      %s96 = scalar_select %p93, %s94, %s95
      %p99 = pneg %p93
      %p100 = scmp.eq.s32.totalorder %s16, 3
      %p101 = por %p99, %p100
      %p102 = scmp.ne.s32.totalorder %s94, %s97
      %p103 = scmp.eq.s32.totalorder %s16, 0
      %p104 = por %p102, %p103
      %p105 = scmp.ne.s32.totalorder %s94, %s97
      %p106 = scmp.eq.s32.totalorder %s21, 3
      %p107 = por %p105, %p106
      %p108 = scmp.ne.s32.totalorder %s97, %s98
      %p109 = scmp.eq.s32.totalorder %s21, 0
      %p110 = por %p108, %p109
      %p111 = scmp.ne.s32.totalorder %s97, %s98
      %p112 = scmp.eq.s32.totalorder %s22, 3
      %p113 = por %p111, %p112
      %p115 = scmp.ne.s32.totalorder %s98, %s114
      %p116 = scmp.eq.s32.totalorder %s22, 0
      %p117 = por %p115, %p116
      %p118 = scmp.le.s32.totalorder 1, %s16
      %p119 = scmp.lt.s32.totalorder %s16, 5
      %p120 = pnand %p118, %p119
      %p121 = pneg %p120
      // Predicated region
      $region9: #{tpu_custom_call.1} parent=5 // pred_check
        _
      $region10: #{tpu_custom_call.1} parent=5 // pred_check_branch
        %123 = sbr.rel (%p120) target = $region12
      $region11: #{tpu_custom_call.1} parent=5 // pred_region
        %s124 = ssub.s32 %s16, 1
        // Predicated region
        $region13: #{tpu_custom_call.1} parent=11 // pred_check
          %p125 = pneg %p63
        $region14: #{tpu_custom_call.1} parent=11 // pred_check_branch
          %127 = sbr.rel (%p125) target = $region16
        $region15: #{tpu_custom_call.1} parent=11 // pred_region
          %s129 = ssub.s32 128, 128
          %130 = vsyncadd [#allocation6], %s129
          %s132 = sshll.u32 [#allocation5], 4
          %s133 = int_to_ptr.vmem [resolvable:$true] %s132
          %135 = dma.hbm_to_vmem [thread:$0]  %s1, 128, %s133, [#allocation6]
        $region16: #{tpu_custom_call.1} parent=11 // pred_fallthru
          _
        // Predicated region
        $region17: #{tpu_custom_call.1} parent=11 // pred_check
          %p136 = pneg %p84
        $region18: #{tpu_custom_call.1} parent=11 // pred_check_branch
          %138 = sbr.rel (%p136) target = $region20
        $region19: #{tpu_custom_call.1} parent=11 // pred_region
          %s140 = ssub.s32 128, 128
          %141 = vsyncadd [#allocation6], %s140
          %s143 = sshll.u32 [#allocation7], 4
          %s144 = int_to_ptr.vmem [resolvable:$true] %s143
          %146 = dma.hbm_to_vmem [thread:$0]  %s2, 128, %s144, [#allocation6]
        $region20: #{tpu_custom_call.1} parent=11 // pred_fallthru
          _
      $region12: #{tpu_custom_call.1} parent=5 // pred_fallthru
        _
      %p147 = scmp.lt.s32.totalorder %s16, 4
      // Predicated region
      $region21: #{tpu_custom_call.1} parent=5 // pred_check
        %p148 = pneg %p147
      $region22: #{tpu_custom_call.1} parent=5 // pred_check_branch
        %150 = sbr.rel (%p148) target = $region24
      $region23: #{tpu_custom_call.1} parent=5 // pred_region
        // Predicated region
        $region25: #{tpu_custom_call.1} parent=23 // pred_check
          %p151 = pneg %p36
        $region26: #{tpu_custom_call.1} parent=23 // pred_check_branch
          %153 = sbr.rel (%p151) target = $region28
        $region27: #{tpu_custom_call.1} parent=23 // pred_region
          %s154 = sand.u32 %s26, 1
          %s155 = scalar_lea.sflag [#allocation3], %s154
          %s156 = sand.u32 %s26, 1
          %s157 = smul.addr %s156, 32
          %s158 = scalar_lea.vmem [#allocation2], %s157
          %s159 = smul.u32 2, %s16
          %s161 = ssub.s32 512, 512
          %162 = vsyncadd %s155, %s161
          %s163 = smul.addr %s159, 2
          %s164 = smul.addr %s163, 128
          %s165 = scalar_lea.hbm %s0, %s164
          %s166 = sshll.u32 %s158, 4
          %s167 = int_to_ptr.vmem [resolvable:$true] %s166
          %172 = dma.hbm_to_vmem [thread:$0]  %s165, 512, %s167, %s155, 256, 256, 16
        $region28: #{tpu_custom_call.1} parent=23 // pred_fallthru
          _
      $region24: #{tpu_custom_call.1} parent=5 // pred_fallthru
        _
      %p173 = scmp.le.s32.totalorder 1, %s16
      %p174 = scmp.lt.s32.totalorder %s16, 5
      %p175 = pnand %p173, %p174
      %p176 = pneg %p175
      // Predicated region
      $region29: #{tpu_custom_call.1} parent=5 // pred_check
        _
      $region30: #{tpu_custom_call.1} parent=5 // pred_check_branch
        %178 = sbr.rel (%p175) target = $region32
      $region31: #{tpu_custom_call.1} parent=5 // pred_region
        %s179 = ssub.s32 %s16, 1
        %s180 = sand.u32 %s29, 1
        %s181 = scalar_lea.sflag [#allocation3], %s180
        %s182 = sand.u32 %s29, 1
        %s183 = smul.addr %s182, 32
        %s184 = scalar_lea.vmem [#allocation2], %s183
        // Predicated region
        $region33: #{tpu_custom_call.1} parent=31 // pred_check
          %p185 = pneg %p42
        $region34: #{tpu_custom_call.1} parent=31 // pred_check_branch
          %187 = sbr.rel (%p185) target = $region36
        $region35: #{tpu_custom_call.1} parent=31 // pred_region
          %188 = dma.done %s181, 512
        $region36: #{tpu_custom_call.1} parent=31 // pred_fallthru
          _
        // Predicated region
        $region37: #{tpu_custom_call.1} parent=31 // pred_check
          %p189 = pneg %p63
        $region38: #{tpu_custom_call.1} parent=31 // pred_check_branch
          %191 = sbr.rel (%p189) target = $region40
        $region39: #{tpu_custom_call.1} parent=31 // pred_region
          %192 = dma.done [#allocation6], 128
        $region40: #{tpu_custom_call.1} parent=31 // pred_fallthru
          _
        // Predicated region
        $region41: #{tpu_custom_call.1} parent=31 // pred_check
          %p193 = pneg %p84
        $region42: #{tpu_custom_call.1} parent=31 // pred_check_branch
          %195 = sbr.rel (%p193) target = $region44
        $region43: #{tpu_custom_call.1} parent=31 // pred_region
          %196 = dma.done [#allocation6], 128
        $region44: #{tpu_custom_call.1} parent=31 // pred_fallthru
          _
        %s197 = sand.u32 %s29, 1
        %s198 = scalar_lea.sflag [#allocation3], %s197
        %s199 = sand.u32 %s29, 1
        %s200 = smul.addr %s199, 32
        %s201 = scalar_lea.vmem [#allocation2], %s200
        %p202 = pneg %p42
        %p203 = pneg %p39
        %p204 = pneg %p63
        %p205 = pneg %p60
        %p206 = pneg %p84
        %p207 = pneg %p81
        %p208 = pneg %p110
        %p209 = pneg %p107
        %s210 = sand.u32 %s97, 1
        %s211 = scalar_lea.sflag [#allocation4], %s210
        %s212 = sand.u32 %s97, 1
        %s213 = smul.addr %s212, 32
        %s214 = scalar_lea.vmem [#allocation8], %s213
        %s215 = smul.u32 2, %s21
        %s216 = smul.u32 2, %s21
        %v217 = vld [vmem:[%s184] sm:$0xff]
        %v218 = vld [vmem:[%s184 + $0x8] sm:$0xff]
        %v219 = vld [vmem:[%s184 + $0x10] sm:$0xff]
        %v220 = vld [vmem:[%s184 + $0x18] sm:$0xff]
        %v221 = vadd.f32 %v217, %v218
        %222 = vadd.xlane.f32.xlu0 %v221
        %v223 = vpop.xlane.xlu0 %222
        %v224 = vadd.f32 %v219, %v220
        %225 = vadd.xlane.f32.xlu0 %v224
        %v226 = vpop.xlane.xlu0 %225
        %v227 = vmul.f32 %v223, 0.00390625
        %v228 = vmul.f32 %v226, 0.00390625
        %v229 = vld [vmem:[#allocation5] sm:$0xff]
        %v230 = vld [vmem:[#allocation7] sm:$0xff]
        %v233 = vlaneseq
        %v234 = vand.u32 %v233, 127
        %v235 = vlaneseq
        %v236 = vshrl.u32 %v235, 7
        %v237 = vsub.s32 %v234, %v236
        %v238 = vrot.slane %v227, %v237
        %v239 = vlaneseq
        %v240 = vshrl.u32 %v239, 7
        %v241 = vsub.s32 %v234, %v240
        %v242 = vrot.slane %v228, %v241
        %vm243 = vcmask 1041409
        %v244 = vsel %vm243, %v242, %v238
        %vm245 = vcmask 64512
        %v246 = vsel %vm245, %v244, 0
        %v249 = vsel %vm245, %v229, 0
        %251 = vmatprep.subr.mxu0 0.0
        %252 = vmatpush1.xpose.msra.mxu0 %v249
        %253 = vmatprep.subr.mxu0 0.0
        %254 = vmatpush1.xpose.msra.mxu0 0.0
        %255 = vmatprep.subr.mxu0 0.0
        %256 = vmatpush1.xpose.msra.mxu0 0.0
        %257 = vmatprep.subr.mxu0 0.0
        %258 = vmatpush1.xpose.msra.mxu0 0.0
        %259 = vmatprep.subr.mxu0 0.0
        %260 = vmatpush1.xpose.msra.mxu0 0.0
        %261 = vmatprep.subr.mxu0 0.0
        %262 = vmatpush1.xpose.msra.mxu0 0.0
        %263 = vmatprep.subr.mxu0 0.0
        %264 = vmatpush1.xpose.msra.mxu0 0.0
        %265 = vmatprep.subr.mxu0 0.0
        %266 = vmatpush1.xpose.msra.mxu0 0.0
        %267 = vmatprep.subr.mxu0 0.0
        %268 = vmatpush1.xpose.msra.mxu0 0.0
        %269 = vmatprep.subr.mxu0 0.0
        %270 = vmatpush1.xpose.msra.mxu0 0.0
        %271 = vmatprep.subr.mxu0 0.0
        %272 = vmatpush1.xpose.msra.mxu0 0.0
        %273 = vmatprep.subr.mxu0 0.0
        %274 = vmatpush1.xpose.msra.mxu0 0.0
        %275 = vmatprep.subr.mxu0 0.0
        %276 = vmatpush1.xpose.msra.mxu0 0.0
        %277 = vmatprep.subr.mxu0 0.0
        %278 = vmatpush1.xpose.msra.mxu0 0.0
        %279 = vmatprep.subr.mxu0 0.0
        %280 = vmatpush1.xpose.msra.mxu0 0.0
        %281 = vmatprep.subr.mxu0 0.0
        %282 = vmatpush1.xpose.msra.mxu0 0.0
        %283 = vmatprep.subr.mxu0 0.0
        %284 = vmatpush1.xpose.msra.mxu0 0.0
        %285 = vmatprep.subr.mxu0 0.0
        %286 = vmatpush1.xpose.msra.mxu0 0.0
        %287 = vmatprep.subr.mxu0 0.0
        %288 = vmatpush1.xpose.msra.mxu0 0.0
        %289 = vmatprep.subr.mxu0 0.0
        %290 = vmatpush1.xpose.msra.mxu0 0.0
        %291 = vmatprep.subr.mxu0 0.0
        %292 = vmatpush1.xpose.msra.mxu0 0.0
        %293 = vmatprep.subr.mxu0 0.0
        %294 = vmatpush1.xpose.msra.mxu0 0.0
        %295 = vmatprep.subr.mxu0 0.0
        %296 = vmatpush1.xpose.msra.mxu0 0.0
        %297 = vmatprep.subr.mxu0 0.0
        %298 = vmatpush1.xpose.msra.mxu0 0.0
        %299 = vmatprep.subr.mxu0 0.0
        %300 = vmatpush1.xpose.msra.mxu0 0.0
        %301 = vmatprep.subr.mxu0 0.0
        %302 = vmatpush1.xpose.msra.mxu0 0.0
        %303 = vmatprep.subr.mxu0 0.0
        %304 = vmatpush1.xpose.msra.mxu0 0.0
        %305 = vmatprep.subr.mxu0 0.0
        %306 = vmatpush1.xpose.msra.mxu0 0.0
        %307 = vmatprep.subr.mxu0 0.0
        %308 = vmatpush1.xpose.msra.mxu0 0.0
        %309 = vmatprep.subr.mxu0 0.0
        %310 = vmatpush1.xpose.msra.mxu0 0.0
        %311 = vmatprep.subr.mxu0 0.0
        %312 = vmatpush1.xpose.msra.mxu0 0.0
        %313 = vmatprep.subr.mxu0 0.0
        %314 = vmatpush1.xpose.msra.mxu0 0.0
        %315 = vmatprep.mubr.f32.mxu0 0.0
        %316 = vmatmul.mubr.f32.gmra.mrb[0].mxu0 %v246
        %v317 = vpop.f32.mrb[0].mxu0
        %v318 = vadd.f32 0.0, %v317
        %v319 = vpop.f32.mrb[0].mxu0
        %320 = vdwg.mxu0
        %vm321 = vcmp.ge.f32.partialorder %v318, 0.0
        %v322 = vmul.f32 %v318, 0.1
        %v323 = vsel %vm321, %v318, %v322
        %v325 = vsel %vm245, %v323, 0
        %v328 = vsel %vm245, %v230, 0
        %330 = vmatprep.subr.mxu0 0.0
        %331 = vmatpush1.xpose.msra.mxu0 %v328
        %332 = vmatprep.subr.mxu0 0.0
        %333 = vmatpush1.xpose.msra.mxu0 0.0
        %334 = vmatprep.subr.mxu0 0.0
        %335 = vmatpush1.xpose.msra.mxu0 0.0
        %336 = vmatprep.subr.mxu0 0.0
        %337 = vmatpush1.xpose.msra.mxu0 0.0
        %338 = vmatprep.subr.mxu0 0.0
        %339 = vmatpush1.xpose.msra.mxu0 0.0
        %340 = vmatprep.subr.mxu0 0.0
        %341 = vmatpush1.xpose.msra.mxu0 0.0
        %342 = vmatprep.subr.mxu0 0.0
        %343 = vmatpush1.xpose.msra.mxu0 0.0
        %344 = vmatprep.subr.mxu0 0.0
        %345 = vmatpush1.xpose.msra.mxu0 0.0
        %346 = vmatprep.subr.mxu0 0.0
        %347 = vmatpush1.xpose.msra.mxu0 0.0
        %348 = vmatprep.subr.mxu0 0.0
        %349 = vmatpush1.xpose.msra.mxu0 0.0
        %350 = vmatprep.subr.mxu0 0.0
        %351 = vmatpush1.xpose.msra.mxu0 0.0
        %352 = vmatprep.subr.mxu0 0.0
        %353 = vmatpush1.xpose.msra.mxu0 0.0
        %354 = vmatprep.subr.mxu0 0.0
        %355 = vmatpush1.xpose.msra.mxu0 0.0
        %356 = vmatprep.subr.mxu0 0.0
        %357 = vmatpush1.xpose.msra.mxu0 0.0
        %358 = vmatprep.subr.mxu0 0.0
        %359 = vmatpush1.xpose.msra.mxu0 0.0
        %360 = vmatprep.subr.mxu0 0.0
        %361 = vmatpush1.xpose.msra.mxu0 0.0
        %362 = vmatprep.subr.mxu0 0.0
        %363 = vmatpush1.xpose.msra.mxu0 0.0
        %364 = vmatprep.subr.mxu0 0.0
        %365 = vmatpush1.xpose.msra.mxu0 0.0
        %366 = vmatprep.subr.mxu0 0.0
        %367 = vmatpush1.xpose.msra.mxu0 0.0
        %368 = vmatprep.subr.mxu0 0.0
        %369 = vmatpush1.xpose.msra.mxu0 0.0
        %370 = vmatprep.subr.mxu0 0.0
        %371 = vmatpush1.xpose.msra.mxu0 0.0
        %372 = vmatprep.subr.mxu0 0.0
        %373 = vmatpush1.xpose.msra.mxu0 0.0
        %374 = vmatprep.subr.mxu0 0.0
        %375 = vmatpush1.xpose.msra.mxu0 0.0
        %376 = vmatprep.subr.mxu0 0.0
        %377 = vmatpush1.xpose.msra.mxu0 0.0
        %378 = vmatprep.subr.mxu0 0.0
        %379 = vmatpush1.xpose.msra.mxu0 0.0
        %380 = vmatprep.subr.mxu0 0.0
        %381 = vmatpush1.xpose.msra.mxu0 0.0
        %382 = vmatprep.subr.mxu0 0.0
        %383 = vmatpush1.xpose.msra.mxu0 0.0
        %384 = vmatprep.subr.mxu0 0.0
        %385 = vmatpush1.xpose.msra.mxu0 0.0
        %386 = vmatprep.subr.mxu0 0.0
        %387 = vmatpush1.xpose.msra.mxu0 0.0
        %388 = vmatprep.subr.mxu0 0.0
        %389 = vmatpush1.xpose.msra.mxu0 0.0
        %390 = vmatprep.subr.mxu0 0.0
        %391 = vmatpush1.xpose.msra.mxu0 0.0
        %392 = vmatprep.subr.mxu0 0.0
        %393 = vmatpush1.xpose.msra.mxu0 0.0
        %394 = vmatprep.mubr.f32.mxu0 0.0
        %395 = vmatmul.mubr.f32.gmra.mrb[0].mxu0 %v325
        %v396 = vpop.f32.mrb[0].mxu0
        %v397 = vadd.f32 0.0, %v396
        %v398 = vpop.f32.mrb[0].mxu0
        %399 = vdwg.mxu0
        %v400 = vxor.u32 %v397, 2147483648
        %v401 = vmul.f32 %v400, 1.442695
        %v402 = vpow.pop %v401
        %v403 = vadd.f32 %v402, 1.0
        %v404 = vrcp.pop %v403
        %v405 = vmul.f32 1.0, %v404
        %v406 = vlaneseq
        %v407 = vshrl.u32 %v406, 7
        %v408 = vsub.s32 0, %v407
        %v409 = vrot.slane %v405, %v408
        %411 = vbcast.lane.b32.xlu0 %v409, 256
        %v412 = vpop.permute.xlu0 %411
        %v413 = vlaneseq
        %v414 = vshrl.u32 %v413, 7
        %v415 = vsub.s32 1, %v414
        %v416 = vrot.slane %v405, %v415
        %418 = vbcast.lane.b32.xlu0 %v416, 256
        %v419 = vpop.permute.xlu0 %418
        %v420 = vmul.f32 %v217, %v412
        %v421 = vmul.f32 %v218, %v412
        %v422 = vmul.f32 %v219, %v419
        %v423 = vmul.f32 %v220, %v419
        %424 = vst [vmem:[%s214] sm:$0xff] %v420
        %425 = vst [vmem:[%s214 + $0x8] sm:$0xff] %v421
        %426 = vst [vmem:[%s214 + $0x10] sm:$0xff] %v422
        %427 = vst [vmem:[%s214 + $0x18] sm:$0xff] %v423
        %s428 = sand.u32 %s97, 1
        %s429 = scalar_lea.sflag [#allocation4], %s428
        %s430 = sand.u32 %s97, 1
        %s431 = smul.addr %s430, 32
        %s432 = scalar_lea.vmem [#allocation8], %s431
        // Predicated region
        $region45: #{tpu_custom_call.1} parent=31 // pred_check
          %p433 = pneg %p107
        $region46: #{tpu_custom_call.1} parent=31 // pred_check_branch
          %435 = sbr.rel (%p433) target = $region48
        $region47: #{tpu_custom_call.1} parent=31 // pred_region
          %s436 = smul.u32 2, %s21
          %s438 = ssub.s32 512, 512
          %439 = vsyncadd %s429, %s438
          %s440 = smul.addr %s436, 2
          %s441 = smul.addr %s440, 128
          %s442 = scalar_lea.hbm %s3, %s441
          %s443 = sshll.u32 %s432, 4
          %s444 = int_to_ptr.vmem [resolvable:$true] %s443
          %449 = dma.vmem_to_hbm [thread:$0]  %s444, 512, %s442, %s429, 256, 256, 16
        $region48: #{tpu_custom_call.1} parent=31 // pred_fallthru
          _
      $region32: #{tpu_custom_call.1} parent=5 // pred_fallthru
        _
      %p450 = scmp.le.s32.totalorder 2, %s16
      // Predicated region
      $region49: #{tpu_custom_call.1} parent=5 // pred_check
        %p451 = pneg %p450
      $region50: #{tpu_custom_call.1} parent=5 // pred_check_branch
        %453 = sbr.rel (%p451) target = $region52
      $region51: #{tpu_custom_call.1} parent=5 // pred_region
        %s454 = ssub.s32 %s16, 2
        // Predicated region
        $region53: #{tpu_custom_call.1} parent=51 // pred_check
          %p455 = pneg %p113
        $region54: #{tpu_custom_call.1} parent=51 // pred_check_branch
          %457 = sbr.rel (%p455) target = $region56
        $region55: #{tpu_custom_call.1} parent=51 // pred_region
          %s458 = sand.u32 %s98, 1
          %s459 = scalar_lea.sflag [#allocation4], %s458
          %s460 = sand.u32 %s98, 1
          %s461 = smul.addr %s460, 32
          %s462 = scalar_lea.vmem [#allocation8], %s461
          %463 = dma.done %s459, 512
        $region56: #{tpu_custom_call.1} parent=51 // pred_fallthru
          _
      $region52: #{tpu_custom_call.1} parent=5 // pred_fallthru
        _
    $region6: #{tpu_custom_call.1} parent=1 // loop_footer
      %s20 = sadd.s32 1, %s16
    $region7: #{tpu_custom_call.1} parent=1 // loop_footer_branch
      %15 = sbr.rel target = $region3
    $region8: #{tpu_custom_call.1} parent=1 // loop_exit
      _
    %464 = vsyncpa [#allocation3], 1
    %s465 = scalar_lea.sflag [#allocation3], 1
    %466 = vsyncpa %s465, 1
    %467 = vsyncpa [#allocation6], 1
    %468 = vsyncpa [#allocation4], 1
    %s469 = scalar_lea.sflag [#allocation4], 1
    %470 = vsyncpa %s469, 1

</llo_original>
